<compile_context>
chip_gen: v7x
topology: tpu7x:2x2x1
jax: 0.10.0
libtpu: 0.0.40
codegen_flags: <defaults>
</compile_context>

<pallas_src>
import functools

import jax
import jax.numpy as jnp
from jax.experimental import pallas as pl
from jax.experimental.pallas import tpu as pltpu


def _gradient_loss_kernel(w_ref, p_ref, t_ref, out_ref, *, height, width,
                          loss_type, n_rows, block_rows):
    """One block = TB flattened images of shape (TB, H*W).

    Writes a single weighted partial sum for this block into out_ref (SMEM (1,1)).
    """
    hw = height * width

    p = p_ref[...]                       # (TB, H*W), input dtype
    t = t_ref[...]
    w = w_ref[...]                       # (2, H*W) f32, VMEM-resident
    wx = w[0:1, :]                       # mask_x / n_x
    wy = w[1:2, :]                       # mask_y / n_y

    def err(d):
        d = d.astype(jnp.float32)
        return jnp.abs(d) if loss_type == "l1" else d * d

    # --- x direction: |p[:, c+1] - p[:, c]| vs. target; reduce before y temps ---
    dx = (jnp.abs(pltpu.roll(p, shift=hw - 1, axis=1) - p)
          - jnp.abs(pltpu.roll(t, shift=hw - 1, axis=1) - t))
    row_acc = jnp.sum(err(dx) * wx, axis=1, keepdims=True)        # (TB, 1) f32

    # --- y direction (x temporaries are dead by now) ---
    dy = (jnp.abs(pltpu.roll(p, shift=hw - width, axis=1) - p)
          - jnp.abs(pltpu.roll(t, shift=hw - width, axis=1) - t))
    row_acc = row_acc + jnp.sum(err(dy) * wy, axis=1, keepdims=True)

    # Zero rows past N (only the last, partial block has any).  (TB,1)-sized op,
    # applied after the lane reduction -> negligible and NaN-safe.
    row_ids = (pl.program_id(0) * block_rows
               + jax.lax.broadcasted_iota(jnp.int32, row_acc.shape, 0))
    row_acc = jnp.where(row_ids < n_rows, row_acc, 0.0)

    out_ref[0, 0] = jnp.sum(row_acc)


def _choose_block_rows(n, hw, itemsize, target_bytes):
    """Rows per block: ~target_bytes per input tile, multiple of 8 (or = N if N <= 8)."""
    if n <= 8:
        return n                                   # single full-extent block
    n_ceil8 = ((n + 7) // 8) * 8
    rows = max(8, (target_bytes // max(1, hw * itemsize)) // 8 * 8)
    rows = min(rows, n_ceil8)
    # v7x megacore: prefer >= 2 grid blocks when each half is still >= ~1 MiB.
    half = (((n + 1) // 2) + 7) // 8 * 8
    if rows > half and half * hw * itemsize >= (1 << 20):
        rows = half
    return rows


def gradient_loss(prediction, target, loss_type="l1", *,
                  block_bytes=2 * 1024 * 1024):
    """Pallas TPU implementation of GradientLoss.forward.

    prediction, target: (B, C, H, W) arrays (NCHW, same convention as PyTorch).
    Returns a scalar float32 loss:
        mean(|gx_pred - gx_tgt|^p) + mean(|gy_pred - gy_tgt|^p)  (p = 1 or 2)
    """
    if loss_type not in ("l1", "l2"):
        raise ValueError("Gradient loss_type must be 'l1' or 'l2'")

    B, C, H, W = prediction.shape
    assert target.shape == prediction.shape
    # NOTE: like the PyTorch reference, H == 1 or W == 1 yields a mean over an
    # empty tensor (NaN weights); no special guard added.

    N = B * C
    HW = H * W

    p_flat = prediction.reshape(N, HW)
    t_flat = target.reshape(N, HW)

    # Precomputed lane weights: validity mask folded with the mean normalisation.
    lane = jnp.arange(HW, dtype=jnp.int32)
    n_x = N * H * (W - 1)
    n_y = N * (H - 1) * W
    wx = ((lane % W) != (W - 1)).astype(jnp.float32) / jnp.float32(n_x)
    wy = (lane < (H - 1) * W).astype(jnp.float32) / jnp.float32(n_y)
    weights = jnp.stack([wx, wy], axis=0)                         # (2, HW) f32

    itemsize = jnp.dtype(prediction.dtype).itemsize
    tb = _choose_block_rows(N, HW, itemsize, block_bytes)
    num_blocks = pl.cdiv(N, tb)

    # TODO(synk): tile the H*W lane axis (with a W-lane halo or a boundary-column
    # correction) for very large images whose flattened rows exceed the ~2 MiB
    # tile budget (e.g. 2048x2048 f32); current scheme needs HW*itemsize*8 to fit.

    kernel = functools.partial(
        _gradient_loss_kernel, height=H, width=W, loss_type=loss_type,
        n_rows=N, block_rows=tb)

    partials = pl.pallas_call(
        kernel,
        out_shape=jax.ShapeDtypeStruct((num_blocks, 1), jnp.float32),
        grid=(num_blocks,),
        in_specs=[
            pl.BlockSpec((2, HW), lambda i: (0, 0)),     # weights, stays resident
            pl.BlockSpec((tb, HW), lambda i: (i, 0)),
            pl.BlockSpec((tb, HW), lambda i: (i, 0)),
        ],
        out_specs=pl.BlockSpec((1, 1), lambda i: (i, 0), memory_space=pltpu.SMEM),
        compiler_params=pltpu.CompilerParams(
            dimension_semantics=("parallel",),           # blocks independent (2-TC split on v7x)
            vmem_limit_bytes=48 * 1024 * 1024,
        ),
    )(weights, p_flat, t_flat)

    return jnp.sum(partials)


def _reference(prediction, target, loss_type="l1"):
    gx_p = jnp.abs(prediction[:, :, :, 1:] - prediction[:, :, :, :-1])
    gx_t = jnp.abs(target[:, :, :, 1:] - target[:, :, :, :-1])
    gy_p = jnp.abs(prediction[:, :, 1:, :] - prediction[:, :, :-1, :])
    gy_t = jnp.abs(target[:, :, 1:, :] - target[:, :, :-1, :])
    if loss_type == "l1":
        lx = jnp.mean(jnp.abs(gx_p - gx_t))
        ly = jnp.mean(jnp.abs(gy_p - gy_t))
    else:
        lx = jnp.mean((gx_p - gx_t) ** 2)
        ly = jnp.mean((gy_p - gy_t) ** 2)
    return lx + ly


if __name__ == "__main__":
    key = jax.random.PRNGKey(0)

    # Main config (matches the module's expected NCHW usage).
    kp, kt = jax.random.split(key)
    B, C, H, W = 2, 4, 16, 16
    prediction = jax.random.normal(kp, (B, C, H, W), dtype=jnp.float32)
    target = jax.random.normal(kt, (B, C, H, W), dtype=jnp.float32)

    loss_l1 = jax.block_until_ready(gradient_loss(prediction, target, "l1"))
    loss_l2 = jax.block_until_ready(gradient_loss(prediction, target, "l2"))
    ref_l1 = _reference(prediction, target, "l1")
    ref_l2 = _reference(prediction, target, "l2")
    assert jnp.allclose(loss_l1, ref_l1, rtol=1e-5, atol=1e-5), (loss_l1, ref_l1)
    assert jnp.allclose(loss_l2, ref_l2, rtol=1e-5, atol=1e-5), (loss_l2, ref_l2)

    # Second config: N = B*C = 3 (odd, < 8) -> single full-extent block.
    kp2, kt2 = jax.random.split(jax.random.PRNGKey(1))
    pred2 = jax.random.normal(kp2, (1, 3, 8, 16), dtype=jnp.float32)
    tgt2 = jax.random.normal(kt2, (1, 3, 8, 16), dtype=jnp.float32)
    out2 = jax.block_until_ready(gradient_loss(pred2, tgt2, "l1"))
    ref2 = _reference(pred2, tgt2, "l1")
    assert jnp.allclose(out2, ref2, rtol=1e-5, atol=1e-5), (out2, ref2)

    # Third config: N = 21 with tiny tiles -> 3 grid steps, last block partial
    # (exercises the no-pad row-mask path).
    kp3, kt3 = jax.random.split(jax.random.PRNGKey(2))
    pred3 = jax.random.normal(kp3, (3, 7, 8, 16), dtype=jnp.float32)
    tgt3 = jax.random.normal(kt3, (3, 7, 8, 16), dtype=jnp.float32)
    out3 = jax.block_until_ready(gradient_loss(pred3, tgt3, "l2", block_bytes=4096))
    ref3 = _reference(pred3, tgt3, "l2")
    assert jnp.allclose(out3, ref3, rtol=1e-5, atol=1e-5), (out3, ref3)

    print("KERNEL_OK")
</pallas_src>

<mosaic_0001>
module attributes {stable_mosaic.version = 11 : i64} {
  func.func @_gradient_loss_kernel(%arg0: i32, %arg1: memref<2x256xf32, #tpu.memory_space<vmem>>, %arg2: memref<8x256xf32, #tpu.memory_space<vmem>>, %arg3: memref<8x256xf32, #tpu.memory_space<vmem>>, %arg4: memref<1x1xf32, #tpu.memory_space<smem>>) attributes {dimension_semantics = [#tpu.dimension_semantics<parallel>], iteration_bounds = array<i64: 1>, scalar_prefetch = 0 : i64, scratch_operands = 0 : i64, tpu.core_type = #tpu.core_type<tc>, window_params = [{pipeline_mode = #tpu.pipeline_mode<synchronous>, transform_indices = @transform_0, window_bounds = array<i64: 2, 256>}, {transform_indices = @transform_1, window_bounds = array<i64: 8, 256>}, {transform_indices = @transform_2, window_bounds = array<i64: 8, 256>}, {transform_indices = @transform_3, window_bounds = array<i64: 1, 1>}]} {
    %c0 = arith.constant 0 : index
    %c0_0 = arith.constant 0 : index
    %0 = vector.load %arg2[%c0, %c0_0] : memref<8x256xf32, #tpu.memory_space<vmem>>, vector<8x256xf32>
    %c0_1 = arith.constant 0 : index
    %c0_2 = arith.constant 0 : index
    %1 = vector.load %arg3[%c0_1, %c0_2] : memref<8x256xf32, #tpu.memory_space<vmem>>, vector<8x256xf32>
    %c0_3 = arith.constant 0 : index
    %c0_4 = arith.constant 0 : index
    %2 = vector.load %arg1[%c0_3, %c0_4] : memref<2x256xf32, #tpu.memory_space<vmem>>, vector<2x256xf32>
    %3 = vector.extract_strided_slice %2 {offsets = [0, 0], sizes = [1, 256], strides = [1, 1]} : vector<2x256xf32> to vector<1x256xf32>
    %4 = vector.extract_strided_slice %2 {offsets = [1, 0], sizes = [1, 256], strides = [1, 1]} : vector<2x256xf32> to vector<1x256xf32>
    %c255_i32 = arith.constant 255 : i32
    %5 = tpu.dynamic_rotate %0 by %c255_i32 dim 1 : vector<8x256xf32>, i32 -> vector<8x256xf32>
    %6 = arith.subf %5, %0 : vector<8x256xf32>
    %7 = math.absf %6 : vector<8x256xf32>
    %c255_i32_5 = arith.constant 255 : i32
    %8 = tpu.dynamic_rotate %1 by %c255_i32_5 dim 1 : vector<8x256xf32>, i32 -> vector<8x256xf32>
    %9 = arith.subf %8, %1 : vector<8x256xf32>
    %10 = math.absf %9 : vector<8x256xf32>
    %11 = arith.subf %7, %10 : vector<8x256xf32>
    %12 = math.absf %11 : vector<8x256xf32>
    %13 = vector.broadcast %3 : vector<1x256xf32> to vector<8x256xf32>
    %14 = arith.mulf %12, %13 : vector<8x256xf32>
    %cst = arith.constant dense<0.000000e+00> : vector<8xf32>
    %15 = vector.multi_reduction <add>, %14, %cst [1] : vector<8x256xf32> to vector<8xf32>
    %16 = vector.shape_cast %15 : vector<8xf32> to vector<8x1xf32>
    %c240_i32 = arith.constant 240 : i32
    %17 = tpu.dynamic_rotate %0 by %c240_i32 dim 1 : vector<8x256xf32>, i32 -> vector<8x256xf32>
    %18 = arith.subf %17, %0 : vector<8x256xf32>
    %19 = math.absf %18 : vector<8x256xf32>
    %c240_i32_6 = arith.constant 240 : i32
    %20 = tpu.dynamic_rotate %1 by %c240_i32_6 dim 1 : vector<8x256xf32>, i32 -> vector<8x256xf32>
    %21 = arith.subf %20, %1 : vector<8x256xf32>
    %22 = math.absf %21 : vector<8x256xf32>
    %23 = arith.subf %19, %22 : vector<8x256xf32>
    %24 = math.absf %23 : vector<8x256xf32>
    %25 = vector.broadcast %4 : vector<1x256xf32> to vector<8x256xf32>
    %26 = arith.mulf %24, %25 : vector<8x256xf32>
    %cst_7 = arith.constant dense<0.000000e+00> : vector<8xf32>
    %27 = vector.multi_reduction <add>, %26, %cst_7 [1] : vector<8x256xf32> to vector<8xf32>
    %28 = vector.shape_cast %27 : vector<8xf32> to vector<8x1xf32>
    %29 = arith.addf %16, %28 : vector<8x1xf32>
    %c8_i32 = arith.constant 8 : i32
    %30 = arith.muli %arg0, %c8_i32 : i32
    %31 = tpu.iota {dimensions = array<i32: 0>} : vector<8x1xi32>
    %32 = vector.broadcast %30 : i32 to vector<8x1xi32>
    %33 = arith.addi %32, %31 : vector<8x1xi32>
    %c8_i32_8 = arith.constant 8 : i32
    %34 = vector.broadcast %c8_i32_8 : i32 to vector<8x1xi32>
    %35 = arith.cmpi slt, %33, %34 : vector<8x1xi32>
    %cst_9 = arith.constant 0.000000e+00 : f32
    %36 = vector.broadcast %cst_9 : f32 to vector<8x1xf32>
    %37 = arith.select %35, %29, %36 : vector<8x1xi1>, vector<8x1xf32>
    %38 = vector.shape_cast %37 : vector<8x1xf32> to vector<1x8x1xf32>
    %cst_10 = arith.constant dense<0.000000e+00> : vector<1xf32>
    %39 = vector.multi_reduction <add>, %38, %cst_10 [1, 2] : vector<1x8x1xf32> to vector<1xf32>
    %40 = vector.shape_cast %39 : vector<1xf32> to vector<1x1x1xf32>
    %41 = vector.extract %40[0, 0, 0] : f32 from vector<1x1x1xf32>
    %c0_11 = arith.constant 0 : index
    %c0_12 = arith.constant 0 : index
    %42 = memref.load %arg4[%c0_11, %c0_12] : memref<1x1xf32, #tpu.memory_space<smem>>
    memref.store %41, %arg4[%c0_11, %c0_12] : memref<1x1xf32, #tpu.memory_space<smem>>
    return
  }
  func.func @transform_0(%arg0: i32) -> (i32, i32) {
    %c0_i32 = arith.constant 0 : i32
    %c0_i32_0 = arith.constant 0 : i32
    %c0_i32_1 = arith.constant 0 : i32
    return %c0_i32, %c0_i32_0 : i32, i32
  }
  func.func @transform_1(%arg0: i32) -> (i32, i32) {
    %c0_i32 = arith.constant 0 : i32
    %c0_i32_0 = arith.constant 0 : i32
    return %arg0, %c0_i32 : i32, i32
  }
  func.func @transform_2(%arg0: i32) -> (i32, i32) {
    %c0_i32 = arith.constant 0 : i32
    %c0_i32_0 = arith.constant 0 : i32
    return %arg0, %c0_i32 : i32, i32
  }
  func.func @transform_3(%arg0: i32) -> (i32, i32) {
    %c0_i32 = arith.constant 0 : i32
    %c0_i32_0 = arith.constant 0 : i32
    return %arg0, %c0_i32 : i32, i32
  }
}

</mosaic_0001>

<llo_original>
// kernel: tpu_custom_call.1
$region0: #{tpu_custom_call.1}
  #allocation0 [shape = 'u32[]', space=smem, size = 0x4, offset = 0x4, fixed_abs, tag = 'smem constant byte address 0x4 - core index']
  #allocation1 [shape = 'u32[144,128]{1,0:T(1,128)}', space=vmem, size = 0x12000, scoped, tag = 'internal scratch']
  %s0 = inlined_call_operand.hbm [shape: f32[2,256], index: 0, kind: input, shape index: {}]
  %s1 = inlined_call_operand.hbm [shape: f32[8,256], index: 1, kind: input, shape index: {}]
  %s2 = inlined_call_operand.hbm [shape: f32[8,256], index: 2, kind: input, shape index: {}]
  %s3 = inlined_call_operand.hbm [shape: f32[1,1], index: 3, kind: output, shape index: {}]
  %s4 = sld [smem:[#allocation0]]
  $region34: #{tpu_custom_call.1} parent=0
    _
  %s6 = ssub.s32 1, %s4
  %s7 = scalar_select 0, %s6, %s4
  $region1: #{tpu_custom_call.1} parent=0
    #allocation2 [shape = 'u8[2048]{0}', space=vmem, size = 0x800, scoped, tag = 'input window, operand 0, single buffered']
    #allocation3 [shape = 's32[1]{0}', space=sflag, size = 0x4, scoped, tag = 'scoped memory for tpu_custom_call.1']
    #allocation4 [shape = 's32[1]{0}', space=sflag, size = 0x4, scoped, tag = 'scoped memory for tpu_custom_call.1']
    #allocation5 [shape = 'u8[8192]{0}', space=vmem, size = 0x2000, scoped, tag = 'input window, operand 1, single buffered']
    #allocation6 [shape = 's32[1]{0}', space=sflag, size = 0x4, scoped, tag = 'scoped memory for tpu_custom_call.1']
    #allocation7 [shape = 'u8[8192]{0}', space=vmem, size = 0x2000, scoped, tag = 'input window, operand 2, single buffered']
    #allocation8 [shape = 'u8[512]{0}', space=smem, size = 0x200, scoped, tag = 'output window, operand 0, single buffered']
    %8 = vsyncpa [#allocation3], 0
    %9 = vsyncpa [#allocation6], 0
    %10 = vsyncpa [#allocation4], 0
    // Predicated region
    $region2: #{tpu_custom_call.1} parent=1 // pred_check
      _
    $region3: #{tpu_custom_call.1} parent=1 // pred_check_branch
      %12 = sbr.rel (0) target = $region5
    $region4: #{tpu_custom_call.1} parent=1 // pred_region
      %s14 = ssub.s32 64, 64
      %15 = vsyncadd [#allocation3], %s14
      %s17 = sshll.u32 [#allocation2], 4
      %s18 = int_to_ptr.vmem [resolvable:$true] %s17
      %20 = dma.hbm_to_vmem [thread:$0]  %s0, 64, %s18, [#allocation3]
    $region5: #{tpu_custom_call.1} parent=1 // pred_fallthru
      _
    // Predicated region
    $region6: #{tpu_custom_call.1} parent=1 // pred_check
      _
    $region7: #{tpu_custom_call.1} parent=1 // pred_check_branch
      %22 = sbr.rel (0) target = $region9
    $region8: #{tpu_custom_call.1} parent=1 // pred_region
      %s24 = ssub.s32 256, 256
      %25 = vsyncadd [#allocation6], %s24
      %s27 = sshll.u32 [#allocation5], 4
      %s28 = int_to_ptr.vmem [resolvable:$true] %s27
      %30 = dma.hbm_to_vmem [thread:$0]  %s1, 256, %s28, [#allocation6]
    $region9: #{tpu_custom_call.1} parent=1 // pred_fallthru
      _
    // Predicated region
    $region10: #{tpu_custom_call.1} parent=1 // pred_check
      _
    $region11: #{tpu_custom_call.1} parent=1 // pred_check_branch
      %32 = sbr.rel (0) target = $region13
    $region12: #{tpu_custom_call.1} parent=1 // pred_region
      %s34 = ssub.s32 256, 256
      %35 = vsyncadd [#allocation6], %s34
      %s37 = sshll.u32 [#allocation7], 4
      %s38 = int_to_ptr.vmem [resolvable:$true] %s37
      %40 = dma.hbm_to_vmem [thread:$0]  %s2, 256, %s38, [#allocation6]
    $region13: #{tpu_custom_call.1} parent=1 // pred_fallthru
      _
    // Predicated region
    $region14: #{tpu_custom_call.1} parent=1 // pred_check
      _
    $region15: #{tpu_custom_call.1} parent=1 // pred_check_branch
      %42 = sbr.rel (0) target = $region17
    $region16: #{tpu_custom_call.1} parent=1 // pred_region
      %43 = dma.done [#allocation3], 64
    $region17: #{tpu_custom_call.1} parent=1 // pred_fallthru
      _
    // Predicated region
    $region18: #{tpu_custom_call.1} parent=1 // pred_check
      _
    $region19: #{tpu_custom_call.1} parent=1 // pred_check_branch
      %45 = sbr.rel (0) target = $region21
    $region20: #{tpu_custom_call.1} parent=1 // pred_region
      %46 = dma.done [#allocation6], 256
    $region21: #{tpu_custom_call.1} parent=1 // pred_fallthru
      _
    // Predicated region
    $region22: #{tpu_custom_call.1} parent=1 // pred_check
      _
    $region23: #{tpu_custom_call.1} parent=1 // pred_check_branch
      %48 = sbr.rel (0) target = $region25
    $region24: #{tpu_custom_call.1} parent=1 // pred_region
      %49 = dma.done [#allocation6], 256
    $region25: #{tpu_custom_call.1} parent=1 // pred_fallthru
      _
    %v50 = vld [vmem:[#allocation5] sm:$0xff]
    %v51 = vld [vmem:[#allocation5 + $0x8] sm:$0xff]
    %v52 = vld [vmem:[#allocation7] sm:$0xff]
    %v53 = vld [vmem:[#allocation7 + $0x8] sm:$0xff]
    %v54 = vld [vmem:[#allocation2] sm:$0xf]
    %55 = vrot.lane.b32.xlu0 %v50, 127
    %v56 = vpop.permute.xlu0 %55
    %57 = vrot.lane.b32.xlu0 %v51, 127
    %v58 = vpop.permute.xlu0 %57
    %v59 = vlaneseq
    %v60 = vand.u32 %v59, 127
    %vm61 = vcmp.lt.s32.totalorder %v60, 127
    %v62 = vsel %vm61, %v56, %v58
    %v63 = vsel %vm61, %v58, %v56
    %v64 = vsub.f32 %v62, %v50
    %v65 = vsub.f32 %v63, %v51
    %v66 = vand.u32 2147483647, %v64
    %v67 = vand.u32 2147483647, %v65
    %68 = vrot.lane.b32.xlu0 %v52, 127
    %v69 = vpop.permute.xlu0 %68
    %70 = vrot.lane.b32.xlu0 %v53, 127
    %v71 = vpop.permute.xlu0 %70
    %v72 = vsel %vm61, %v69, %v71
    %v73 = vsel %vm61, %v71, %v69
    %v74 = vsub.f32 %v72, %v52
    %v75 = vsub.f32 %v73, %v53
    %v76 = vand.u32 2147483647, %v74
    %v77 = vand.u32 2147483647, %v75
    %v78 = vsub.f32 %v66, %v76
    %v79 = vsub.f32 %v67, %v77
    %v80 = vand.u32 2147483647, %v78
    %v81 = vand.u32 2147483647, %v79
    %v83 = vlaneseq
    %v84 = vshrl.u32 %v83, 7
    %v85 = vsub.s32 0, %v84
    %v86 = vrot.slane %v54, %v85
    %v87 = vlaneseq
    %v88 = vshrl.u32 %v87, 7
    %v89 = vsub.s32 2, %v88
    %v90 = vrot.slane %v54, %v89
    %v93 = vlaneseq
    %v94 = vshrl.u32 %v93, 7
    %v95 = vsub.s32 0, %v94
    %v96 = vrot.slane %v86, %v95
    %v97 = vlaneseq
    %v98 = vshrl.u32 %v97, 7
    %v99 = vsub.s32 0, %v98
    %v100 = vrot.slane %v90, %v99
    %v101 = vmul.f32 %v80, %v96
    %v102 = vmul.f32 %v81, %v100
    %v103 = vadd.f32 %v101, %v102
    %104 = vadd.xlane.f32.xlu0 %v103
    %v105 = vpop.xlane.xlu0 %104
    %106 = vrot.lane.b32.xlu0 %v50, 112
    %v107 = vpop.permute.xlu0 %106
    %108 = vrot.lane.b32.xlu0 %v51, 112
    %v109 = vpop.permute.xlu0 %108
    %vm110 = vcmp.lt.s32.totalorder %v60, 112
    %v111 = vsel %vm110, %v107, %v109
    %v112 = vsel %vm110, %v109, %v107
    %v113 = vsub.f32 %v111, %v50
    %v114 = vsub.f32 %v112, %v51
    %v115 = vand.u32 2147483647, %v113
    %v116 = vand.u32 2147483647, %v114
    %117 = vrot.lane.b32.xlu0 %v52, 112
    %v118 = vpop.permute.xlu0 %117
    %119 = vrot.lane.b32.xlu0 %v53, 112
    %v120 = vpop.permute.xlu0 %119
    %v121 = vsel %vm110, %v118, %v120
    %v122 = vsel %vm110, %v120, %v118
    %v123 = vsub.f32 %v121, %v52
    %v124 = vsub.f32 %v122, %v53
    %v125 = vand.u32 2147483647, %v123
    %v126 = vand.u32 2147483647, %v124
    %v127 = vsub.f32 %v115, %v125
    %v128 = vsub.f32 %v116, %v126
    %v129 = vand.u32 2147483647, %v127
    %v130 = vand.u32 2147483647, %v128
    %v131 = vlaneseq
    %v132 = vshrl.u32 %v131, 7
    %v133 = vsub.s32 1, %v132
    %v134 = vrot.slane %v54, %v133
    %v135 = vlaneseq
    %v136 = vshrl.u32 %v135, 7
    %v137 = vsub.s32 3, %v136
    %v138 = vrot.slane %v54, %v137
    %v141 = vlaneseq
    %v142 = vshrl.u32 %v141, 7
    %v143 = vsub.s32 1, %v142
    %v144 = vrot.slane %v134, %v143
    %v145 = vlaneseq
    %v146 = vshrl.u32 %v145, 7
    %v147 = vsub.s32 1, %v146
    %v148 = vrot.slane %v138, %v147
    %v149 = vmul.f32 %v129, %v144
    %v150 = vmul.f32 %v130, %v148
    %v151 = vadd.f32 %v149, %v150
    %152 = vadd.xlane.f32.xlu0 %v151
    %v153 = vpop.xlane.xlu0 %152
    %v154 = vadd.f32 %v105, %v153
    %s155 = smul.u32 0, 8
    %v156 = vlaneseq
    %v157 = vshrl.u32 %v156, 7
    %v158 = vstv %s155
    %v159 = vadd.s32 %v158, %v157
    %vm160 = vcmp.lt.s32.totalorder %v159, 8
    %v161 = vsel %vm160, %v154, 0.0
    %vm162 = vcmask 7168
    %v163 = vsel %vm162, %v161, 0.0
    %164 = vadd.xlane.f32.xlu0 %v163
    %v165 = vpop.xlane.xlu0 %164
    %v166 = vrot.slane %v165, 4
    %v167 = vadd.f32 %v165, %v166
    %v168 = vrot.slane %v167, 2
    %v169 = vadd.f32 %v167, %v168
    %v170 = vrot.slane %v169, 1
    %v171 = vadd.f32 %v169, %v170
    %s172 = vtos %v171
    %s173 = scalar_lea.smem [#allocation8], 0
    %174 = sst [smem:[%s173]] %s172
    // Predicated region
    $region26: #{tpu_custom_call.1} parent=1 // pred_check
      _
    $region27: #{tpu_custom_call.1} parent=1 // pred_check_branch
      %176 = sbr.rel (0) target = $region29
    $region28: #{tpu_custom_call.1} parent=1 // pred_region
      %s178 = ssub.s32 16, 16
      %179 = vsyncadd [#allocation4], %s178
      %182 = dma.smem_to_hbm [#allocation8], 16, %s3, [#allocation4]
    $region29: #{tpu_custom_call.1} parent=1 // pred_fallthru
      _
    // Predicated region
    $region30: #{tpu_custom_call.1} parent=1 // pred_check
      _
    $region31: #{tpu_custom_call.1} parent=1 // pred_check_branch
      %184 = sbr.rel (0) target = $region33
    $region32: #{tpu_custom_call.1} parent=1 // pred_region
      %185 = dma.done [#allocation4], 16
    $region33: #{tpu_custom_call.1} parent=1 // pred_fallthru
      _
    %186 = sfence
    %187 = vsyncpa [#allocation3], 1
    %188 = vsyncpa [#allocation6], 1
    %189 = vsyncpa [#allocation4], 1

</llo_original>
